<compile_context>
chip_gen: v7x
topology: tpu7x:2x2x1
jax: 0.10.0
libtpu: 0.0.40
codegen_flags: <defaults>
</compile_context>

<pallas_src>
import jax
import jax.numpy as jnp
from jax.experimental import pallas as pl
from jax.experimental.pallas import tpu as pltpu


_DEFAULT_TOKENS_PER_BLOCK = 256      # tokens gathered per grid step
_SMEM_IDS_BYTES_CAP = 128 << 10      # max scalar-prefetched ids bytes per pallas_call


def _round_up(x, m):
    return ((x + m - 1) // m) * m


def _chip_config():
    """Returns (onehot_max_vocab, num_dma_slots, vmem_capacity_bytes)."""
    vmem_cap = 64 << 20                     # safe floor (v7x per-core VMEM)
    try:
        vmem_cap = int(pltpu.get_tpu_info().vmem_capacity_bytes)
    except Exception:
        pass
    kind = ""
    try:
        kind = jax.devices()[0].device_kind.lower()
    except Exception:
        pass
    if "v5" in kind:
        # Weak MXU (197 TF/s): the one-hot path's Vx FLOP amplification loses early.
        max_vocab, slots = 1024, 32
    elif "v7" in kind:
        # Very fast HBM (3.2 TB/s) makes the row-DMA gather cheap; small VMEM.
        max_vocab, slots = 1024, 64
    else:
        # v6e / default.
        max_vocab, slots = 2048, 32
    return max_vocab, slots, vmem_cap


def _resident_vmem_estimate(v, e, tok, table_itemsize, out_itemsize):
    # Conservative: table counted twice in case the Buffered(1) request is
    # ignored and the resident table still gets double-buffered.
    return (2 * v * e * table_itemsize          # resident table
            + 2 * tok * e * out_itemsize        # double-buffered output block
            + tok * v * 4                       # one-hot / compare temporaries
            + 4 * tok * 4)                      # ids blocks


# ---------------------------------------------------------------------------
# Path 1: VMEM-resident bf16 table, bf16 one-hot MXU gather (small vocab).
# ---------------------------------------------------------------------------
def _embed_onehot_kernel(ids_ref, table_ref, out_ref):
    # ids_ref:   (TOK, 1) int32  token ids of this block
    # table_ref: (V, E)   bf16   full embedding table (VMEM resident)
    # out_ref:   (TOK, E)        gathered embeddings
    vocab = table_ref.shape[0]
    ids_col = ids_ref[...]                                            # (TOK, 1)
    # (1, V) lane iota is ~TOK/8 x cheaper to generate than a (TOK, V) iota;
    # the compare broadcasts it, and the result is emitted directly as bf16.
    vocab_row = jax.lax.broadcasted_iota(jnp.int32, (1, vocab), 1)    # (1, V)
    onehot = (vocab_row == ids_col).astype(jnp.bfloat16)              # (TOK, V) bf16
    out_ref[...] = jnp.dot(
        onehot, table_ref[...], preferred_element_type=jnp.float32
    ).astype(out_ref.dtype)


def _embed_resident(flat_ids, table_op, out_dtype, *, tok, num_blocks,
                    vmem_cap, vmem_est):
    n_pad = tok * num_blocks
    v, e = table_op.shape
    ids_2d = flat_ids.reshape(n_pad, 1)

    # Use most of physical VMEM (96 MiB on 128 MiB parts, 48 MiB on v7x) but
    # never declare less than the estimated footprint.
    vmem_limit = int(min(max(vmem_est + (16 << 20), 32 << 20), (3 * vmem_cap) // 4))
    vmem_limit = max(vmem_limit, int(vmem_est) + (4 << 20))

    def build(single_buffer_table):
        if single_buffer_table:
            # Constant-index resident table: a second pipeline buffer is pure
            # VMEM waste (critical on v7x's 64 MiB VMEM) -> request Buffered(1).
            table_spec = pl.BlockSpec((v, e), lambda i: (0, 0),
                                      pipeline_mode=pl.Buffered(1))
        else:
            table_spec = pl.BlockSpec((v, e), lambda i: (0, 0))
        return pl.pallas_call(
            _embed_onehot_kernel,
            out_shape=jax.ShapeDtypeStruct((n_pad, e), out_dtype),
            grid_spec=pltpu.PrefetchScalarGridSpec(
                num_scalar_prefetch=0,
                grid=(num_blocks,),
                in_specs=[
                    pl.BlockSpec((tok, 1), lambda i: (i, 0)),   # ids for this block
                    table_spec,                                 # full table, loaded once
                ],
                out_specs=pl.BlockSpec((tok, e), lambda i: (i, 0)),
            ),
            compiler_params=pltpu.CompilerParams(
                dimension_semantics=("parallel",),
                vmem_limit_bytes=vmem_limit,
            ),
        )

    try:
        return build(True)(ids_2d, table_op)
    except Exception:
        # pipeline_mode=Buffered(1) unsupported on this jax version: fall back
        # to the default double-buffered table spec (vmem_est already covers it).
        return build(False)(ids_2d, table_op)


# ---------------------------------------------------------------------------
# Path 2: table in HBM, manual multi-in-flight row-DMA gather (large vocab).
# ---------------------------------------------------------------------------
def _make_dma_gather_kernel(tok, nsem):
    def kernel(ids_smem, table_hbm, out_ref, sems):
        # ids_smem:  (N_chunk,) int32 in SMEM (scalar-prefetched for this call)
        # table_hbm: (V, E) raw HBM ref (memory_space=pl.ANY)
        # out_ref:   (TOK, E) VMEM output block; rows are DMA'd straight into it
        # sems:      (nsem,) DMA semaphores -> nsem row copies in flight
        base = pl.program_id(0) * tok

        def issue(step, row):
            pltpu.make_async_copy(
                table_hbm.at[pl.ds(row, 1), :],
                out_ref.at[pl.ds(step, 1), :],
                sems.at[step % nsem],
            ).start()

        def wait(step):
            pltpu.make_async_copy(
                table_hbm.at[pl.ds(0, 1), :],      # src only fixes the copy size
                out_ref.at[pl.ds(step, 1), :],
                sems.at[step % nsem],
            ).wait()

        # Prologue: fill every DMA slot.
        for s in range(min(tok, nsem)):
            issue(s, ids_smem[base + s])

        # Steady state: retire the copy occupying this slot, then reuse it.
        # The scalar id read is hoisted ABOVE the wait: a DMA .wait() breaks
        # SMEM sst->sld forwarding and would stall the read every iteration.
        if tok > nsem:
            def body(s, carry):
                row = ids_smem[base + s]
                wait(s - nsem)
                issue(s, row)
                return carry
            jax.lax.fori_loop(nsem, tok, body, 0)

        # Epilogue: drain the remaining in-flight copies before block writeback.
        for s in range(max(0, tok - nsem), tok):
            wait(s)

    return kernel


def _embed_hbm_gather(flat_ids, table, *, tok, num_blocks, nslots):
    n_pad = tok * num_blocks
    v, e = table.shape
    nsem = min(nslots, tok)
    return pl.pallas_call(
        _make_dma_gather_kernel(tok, nsem),
        out_shape=jax.ShapeDtypeStruct((n_pad, e), table.dtype),
        grid_spec=pltpu.PrefetchScalarGridSpec(
            num_scalar_prefetch=1,                           # ids -> SMEM
            grid=(num_blocks,),
            in_specs=[pl.BlockSpec(memory_space=pl.ANY)],    # table stays in HBM
            out_specs=pl.BlockSpec((tok, e), lambda i, ids: (i, 0)),
            scratch_shapes=[pltpu.SemaphoreType.DMA((nsem,))],
        ),
        compiler_params=pltpu.CompilerParams(
            dimension_semantics=("parallel",),
        ),
    )(flat_ids, table)


def _embed_hbm_gather_chunked(flat_ids, table, *, tok, num_blocks, nslots):
    # 1-D SMEM scalar prefetch pads to next_pow2(4N) bytes; chunk the call so
    # each pallas_call's ids stay well inside SMEM at very large B*T.
    n_pad = tok * num_blocks
    blocks_per_call = max(1, _SMEM_IDS_BYTES_CAP // (4 * tok))
    tokens_per_call = blocks_per_call * tok
    if tokens_per_call >= n_pad:
        return _embed_hbm_gather(flat_ids, table, tok=tok,
                                 num_blocks=num_blocks, nslots=nslots)
    outs = []
    for start in range(0, n_pad, tokens_per_call):
        stop = min(start + tokens_per_call, n_pad)
        outs.append(_embed_hbm_gather(
            flat_ids[start:stop], table, tok=tok,
            num_blocks=(stop - start) // tok, nslots=nslots))
    return jnp.concatenate(outs, axis=0)


# ---------------------------------------------------------------------------
# Public wrapper == WordEmbedding.forward
# ---------------------------------------------------------------------------
def word_embedding_forward(ids, table, *, tokens_per_block=_DEFAULT_TOKENS_PER_BLOCK,
                           force_path=None):
    """out[b, t, :] = table[ids[b, t], :]  (both module branches)."""
    b, t = ids.shape
    v, e = table.shape
    n = b * t

    max_vocab, nslots, vmem_cap = _chip_config()

    # Lane-dense output blocks / full-lane row DMAs: pad E to a multiple of 128.
    e_pad = _round_up(e, 128)
    if e_pad != e:
        table = jnp.pad(table, ((0, 0), (0, e_pad - e)))

    out_dtype = table.dtype
    out_itemsize = jnp.dtype(out_dtype).itemsize
    sub = max(8, 32 // out_itemsize)          # f32 -> 8 sublanes, bf16 -> 16

    tok = max(sub, _round_up(min(tokens_per_block, n), sub))
    # Keep >= 2 grid blocks when there is enough work so v7x megacore can
    # actually split the "parallel" token axis across its two TensorCores.
    if n >= 2 * sub and _round_up(n, tok) // tok < 2:
        tok = max(sub, _round_up(-(-n // 2), sub))
    n_pad = _round_up(n, tok)
    num_blocks = n_pad // tok

    flat_ids = ids.reshape(n).astype(jnp.int32)
    if n_pad != n:
        flat_ids = jnp.pad(flat_ids, (0, n_pad - n))   # pad with id 0; sliced off below

    # Path choice: the one-hot MXU gather does V*E MACs per token vs E bytes of
    # DMA per token (Vx FLOP amplification), so it only wins for small,
    # chip-dependent vocabularies AND when the bf16 table + temporaries fit VMEM.
    table_itemsize = 2 if table.dtype == jnp.float32 else jnp.dtype(table.dtype).itemsize
    vmem_est = _resident_vmem_estimate(v, e_pad, tok, table_itemsize, out_itemsize)
    use_resident = (v <= max_vocab) and (vmem_est + (16 << 20) <= (3 * vmem_cap) // 4)
    if force_path == "resident":
        use_resident = True
    elif force_path == "hbm":
        use_resident = False

    if use_resident:
        # bf16 operands: f32xf32 is emulated as multiple bf16 MXU passes; bf16
        # operands with f32 accumulation are ~3x faster and halve the resident
        # table footprint.  Rows are exact up to bf16 rounding of the table
        # values (use force_path="hbm" for a bit-exact row copy).
        table_op = table.astype(jnp.bfloat16) if table.dtype == jnp.float32 else table
        out_flat = _embed_resident(flat_ids, table_op, out_dtype,
                                   tok=tok, num_blocks=num_blocks,
                                   vmem_cap=vmem_cap, vmem_est=vmem_est)
    else:
        out_flat = _embed_hbm_gather_chunked(flat_ids, table, tok=tok,
                                             num_blocks=num_blocks, nslots=nslots)

    out = out_flat[:n].reshape(b, t, e_pad)
    if e_pad != e:
        out = out[..., :e]
    return out


if __name__ == "__main__":
    key = jax.random.PRNGKey(0)
    k_table, k_ids = jax.random.split(key)

    V, E = 32, 128        # vocabulary size, embedding_dim
    B, T = 2, 8           # batch, sequence length

    table = jax.random.normal(k_table, (V, E), dtype=jnp.float32)
    ids = jax.random.randint(k_ids, (B, T), minval=0, maxval=V, dtype=jnp.int32)

    ref = table[ids]      # == torch nn.Embedding lookup

    # Default (auto) path -- small vocab, so VMEM-resident bf16 one-hot MXU gather.
    out_auto = jax.block_until_ready(word_embedding_forward(ids, table))
    assert out_auto.shape == (B, T, E)
    assert out_auto.dtype == jnp.float32
    assert jnp.allclose(out_auto, ref, rtol=1e-2, atol=1e-2)

    # Resident path explicitly: exact up to bf16 rounding of the table rows.
    out_resident = jax.block_until_ready(
        word_embedding_forward(ids, table, force_path="resident"))
    assert out_resident.shape == (B, T, E)
    assert jnp.allclose(out_resident, ref, rtol=1e-2, atol=1e-2)

    # Large-vocab path (forced): manual multi-in-flight row-DMA gather from HBM.
    # Pure memory copies -> bit exact.
    out_hbm = jax.block_until_ready(
        word_embedding_forward(ids, table, force_path="hbm"))
    assert out_hbm.shape == (B, T, E)
    assert jnp.array_equal(out_hbm, ref)

    print("KERNEL_OK")
</pallas_src>

<mosaic_0001>
module attributes {stable_mosaic.version = 11 : i64} {
  func.func @_embed_onehot_kernel(%arg0: i32, %arg1: memref<8x1xi32, #tpu.memory_space<vmem>>, %arg2: memref<32x128xbf16, #tpu.memory_space<vmem>>, %arg3: memref<8x128xf32, #tpu.memory_space<vmem>>) attributes {dimension_semantics = [#tpu.dimension_semantics<parallel>], iteration_bounds = array<i64: 2>, scalar_prefetch = 0 : i64, scratch_operands = 0 : i64, tpu.core_type = #tpu.core_type<tc>, window_params = [{transform_indices = @transform_0, window_bounds = array<i64: 8, 1>}, {pipeline_mode = #tpu.pipeline_mode<synchronous>, transform_indices = @transform_1, window_bounds = array<i64: 32, 128>}, {transform_indices = @transform_2, window_bounds = array<i64: 8, 128>}]} {
    %c0 = arith.constant 0 : index
    %c0_0 = arith.constant 0 : index
    %0 = vector.load %arg1[%c0, %c0_0] : memref<8x1xi32, #tpu.memory_space<vmem>>, vector<8x1xi32>
    %1 = tpu.iota {dimensions = array<i32: 1>} : vector<1x32xi32>
    %2 = vector.broadcast %1 : vector<1x32xi32> to vector<8x32xi32>
    %3 = vector.broadcast %0 : vector<8x1xi32> to vector<8x32xi32>
    %4 = arith.cmpi eq, %2, %3 : vector<8x32xi32>
    %5 = arith.extui %4 : vector<8x32xi1> to vector<8x32xi32>
    %6 = arith.sitofp %5 : vector<8x32xi32> to vector<8x32xf32>
    %7 = arith.truncf %6 : vector<8x32xf32> to vector<8x32xbf16>
    %c0_1 = arith.constant 0 : index
    %c0_2 = arith.constant 0 : index
    %8 = vector.load %arg2[%c0_1, %c0_2] : memref<32x128xbf16, #tpu.memory_space<vmem>>, vector<32x128xbf16>
    %cst = arith.constant dense<0.000000e+00> : vector<8x128xf32>
    %9 = tpu.matmul %7, %8, %cst {dimension_numbers = #tpu.dot_dimension_numbers<[1], [0], [0], [1], [0, 0, 1, 1], [], []>} : vector<8x32xbf16>, vector<32x128xbf16>, vector<8x128xf32> -> vector<8x128xf32>
    %c0_3 = arith.constant 0 : index
    %c0_4 = arith.constant 0 : index
    %10 = vector.load %arg3[%c0_3, %c0_4] : memref<8x128xf32, #tpu.memory_space<vmem>>, vector<8x128xf32>
    tpu.vector_store %arg3[%c0_3, %c0_4], %9 {strides = array<i32>} : memref<8x128xf32, #tpu.memory_space<vmem>>, vector<8x128xf32>,
    return
  }
  func.func @transform_0(%arg0: i32) -> (i32, i32) {
    %c0_i32 = arith.constant 0 : i32
    %c0_i32_0 = arith.constant 0 : i32
    return %arg0, %c0_i32 : i32, i32
  }
  func.func @transform_1(%arg0: i32) -> (i32, i32) {
    %c0_i32 = arith.constant 0 : i32
    %c0_i32_0 = arith.constant 0 : i32
    %c0_i32_1 = arith.constant 0 : i32
    return %c0_i32, %c0_i32_0 : i32, i32
  }
  func.func @transform_2(%arg0: i32) -> (i32, i32) {
    %c0_i32 = arith.constant 0 : i32
    %c0_i32_0 = arith.constant 0 : i32
    return %arg0, %c0_i32 : i32, i32
  }
}

module attributes {stable_mosaic.version = 11 : i64} {
  func.func @_embed_onehot_kernel(%arg0: i32, %arg1: memref<8x1xi32, #tpu.memory_space<vmem>>, %arg2: memref<32x128xbf16, #tpu.memory_space<vmem>>, %arg3: memref<8x128xf32, #tpu.memory_space<vmem>>) attributes {dimension_semantics = [#tpu.dimension_semantics<parallel>], iteration_bounds = array<i64: 2>, scalar_prefetch = 0 : i64, scratch_operands = 0 : i64, tpu.core_type = #tpu.core_type<tc>, window_params = [{transform_indices = @transform_0, window_bounds = array<i64: 8, 1>}, {pipeline_mode = #tpu.pipeline_mode<synchronous>, transform_indices = @transform_1, window_bounds = array<i64: 32, 128>}, {transform_indices = @transform_2, window_bounds = array<i64: 8, 128>}]} {
    %c0 = arith.constant 0 : index
    %c0_0 = arith.constant 0 : index
    %0 = vector.load %arg1[%c0, %c0_0] : memref<8x1xi32, #tpu.memory_space<vmem>>, vector<8x1xi32>
    %1 = tpu.iota {dimensions = array<i32: 1>} : vector<1x32xi32>
    %2 = vector.broadcast %1 : vector<1x32xi32> to vector<8x32xi32>
    %3 = vector.broadcast %0 : vector<8x1xi32> to vector<8x32xi32>
    %4 = arith.cmpi eq, %2, %3 : vector<8x32xi32>
    %5 = arith.extui %4 : vector<8x32xi1> to vector<8x32xi32>
    %6 = arith.sitofp %5 : vector<8x32xi32> to vector<8x32xf32>
    %7 = arith.truncf %6 : vector<8x32xf32> to vector<8x32xbf16>
    %c0_1 = arith.constant 0 : index
    %c0_2 = arith.constant 0 : index
    %8 = vector.load %arg2[%c0_1, %c0_2] : memref<32x128xbf16, #tpu.memory_space<vmem>>, vector<32x128xbf16>
    %cst = arith.constant dense<0.000000e+00> : vector<8x128xf32>
    %9 = tpu.matmul %7, %8, %cst {dimension_numbers = #tpu.dot_dimension_numbers<[1], [0], [0], [1], [0, 0, 1, 1], [], []>} : vector<8x32xbf16>, vector<32x128xbf16>, vector<8x128xf32> -> vector<8x128xf32>
    %c0_3 = arith.constant 0 : index
    %c0_4 = arith.constant 0 : index
    %10 = vector.load %arg3[%c0_3, %c0_4] : memref<8x128xf32, #tpu.memory_space<vmem>>, vector<8x128xf32>
    tpu.vector_store %arg3[%c0_3, %c0_4], %9 {strides = array<i32>} : memref<8x128xf32, #tpu.memory_space<vmem>>, vector<8x128xf32>,
    return
  }
  func.func @transform_0(%arg0: i32) -> (i32, i32) {
    %c0_i32 = arith.constant 0 : i32
    %c0_i32_0 = arith.constant 0 : i32
    return %arg0, %c0_i32 : i32, i32
  }
  func.func @transform_1(%arg0: i32) -> (i32, i32) {
    %c0_i32 = arith.constant 0 : i32
    %c0_i32_0 = arith.constant 0 : i32
    %c0_i32_1 = arith.constant 0 : i32
    return %c0_i32, %c0_i32_0 : i32, i32
  }
  func.func @transform_2(%arg0: i32) -> (i32, i32) {
    %c0_i32 = arith.constant 0 : i32
    %c0_i32_0 = arith.constant 0 : i32
    return %arg0, %c0_i32 : i32, i32
  }
}

</mosaic_0001>

<llo_original>
// kernel: tpu_custom_call.1
$region0: #{tpu_custom_call.1}
  #allocation0 [shape = 'u32[]', space=smem, size = 0x4, offset = 0x4, fixed_abs, tag = 'smem constant byte address 0x4 - core index']
  #allocation1 [shape = 'u32[144,128]{1,0:T(1,128)}', space=vmem, size = 0x12000, scoped, tag = 'internal scratch']
  %s0 = inlined_call_operand.vmem [shape: s32[16,1], index: 0, kind: input, shape index: {}]
  %s1 = inlined_call_operand.vmem [shape: bf16[32,128], index: 1, kind: input, shape index: {}]
  %s2 = inlined_call_operand.hbm [shape: f32[16,128], index: 2, kind: output, shape index: {}]
  %s3 = sld [smem:[#allocation0]]
  $region41: #{tpu_custom_call.1} parent=0
    _
  %s5 = ssub.s32 1, %s3
  %s6 = scalar_select 0, %s5, %s3
  $region1: #{tpu_custom_call.1} parent=0
    #allocation2 [shape = 'u8[8192]{0}', space=vmem, size = 0x2000, scoped, tag = 'output window, operand 0']
    #allocation3 [shape = 's32[2]{0}', space=sflag, size = 0x8, scoped, tag = 'scoped memory for tpu_custom_call.1']
    %7 = vsyncpa [#allocation3], 0
    %s8 = scalar_lea.sflag [#allocation3], 1
    %9 = vsyncpa %s8, 0
    loop: start=0, step=1, limit=4
    $region2: #{tpu_custom_call.1} parent=1 // loop_pre_header
      _
    $region3: #{tpu_custom_call.1} parent=1 // loop_header
      %s11 = sphi 0, %s15
      %p12 = scmp.ge.s32.totalorder %s11, 4
      %s21 = sphi 0, %s23
      %s24 = sphi 0, %s21
      %s25 = sphi 0, %s24
      %s41 = sphi 0, %s25
      %s45 = sphi 0, %s45
      %s47 = sphi 0, %s45
      %s48 = sphi 0, %s47
      %s62 = sphi 0, %s48
      %s68 = sphi 0, %s70
      %s71 = sphi 0, %s68
      %s72 = sphi 0, %s71
      %s88 = sphi 0, %s72
    $region4: #{tpu_custom_call.1} parent=1 // loop_header_branch
      %14 = sbr.rel (%p12) target = $region8
    $region5: #{tpu_custom_call.1} parent=1 // loop_body
      %s16 = ssub.s32 %s11, 1
      %s17 = ssub.s32 %s11, 2
      %s18 = sadd.s32 %s11, 1
      %s19 = ssub.s32 %s11, %s18
      %p20 = scmp.eq.s32.totalorder %s19, 0
      %s22 = sadd.s32 %s21, 1
      %s23 = scalar_select %p20, %s21, %s22
      %p26 = pneg %p20
      %p27 = scmp.eq.s32.totalorder %s11, 1
      %p28 = por %p26, %p27
      %p29 = scmp.ne.s32.totalorder %s21, %s24
      %p30 = scmp.eq.s32.totalorder %s11, 0
      %p31 = por %p29, %p30
      %p32 = scmp.ne.s32.totalorder %s21, %s24
      %p33 = scmp.eq.s32.totalorder %s16, 1
      %p34 = por %p32, %p33
      %p35 = scmp.ne.s32.totalorder %s24, %s25
      %p36 = scmp.eq.s32.totalorder %s16, 0
      %p37 = por %p35, %p36
      %p38 = scmp.ne.s32.totalorder %s24, %s25
      %p39 = scmp.eq.s32.totalorder %s17, 1
      %p40 = por %p38, %p39
      %p42 = scmp.ne.s32.totalorder %s25, %s41
      %p43 = scmp.eq.s32.totalorder %s17, 0
      %p44 = por %p42, %p43
      %s46 = sadd.s32 %s45, 1
      %p49 = scmp.eq.s32.totalorder %s11, 1
      %p50 = scmp.ne.s32.totalorder %s45, %s47
      %p51 = scmp.eq.s32.totalorder %s11, 0
      %p52 = por %p50, %p51
      %p53 = scmp.ne.s32.totalorder %s45, %s47
      %p54 = scmp.eq.s32.totalorder %s16, 1
      %p55 = por %p53, %p54
      %p56 = scmp.ne.s32.totalorder %s47, %s48
      %p57 = scmp.eq.s32.totalorder %s16, 0
      %p58 = por %p56, %p57
      %p59 = scmp.ne.s32.totalorder %s47, %s48
      %p60 = scmp.eq.s32.totalorder %s17, 1
      %p61 = por %p59, %p60
      %p63 = scmp.ne.s32.totalorder %s48, %s62
      %p64 = scmp.eq.s32.totalorder %s17, 0
      %p65 = por %p63, %p64
      %s66 = ssub.s32 %s11, %s18
      %p67 = scmp.eq.s32.totalorder %s66, 0
      %s69 = sadd.s32 %s68, 1
      %s70 = scalar_select %p67, %s68, %s69
      %p73 = pneg %p67
      %p74 = scmp.eq.s32.totalorder %s11, 1
      %p75 = por %p73, %p74
      %p76 = scmp.ne.s32.totalorder %s68, %s71
      %p77 = scmp.eq.s32.totalorder %s11, 0
      %p78 = por %p76, %p77
      %p79 = scmp.ne.s32.totalorder %s68, %s71
      %p80 = scmp.eq.s32.totalorder %s16, 1
      %p81 = por %p79, %p80
      %p82 = scmp.ne.s32.totalorder %s71, %s72
      %p83 = scmp.eq.s32.totalorder %s16, 0
      %p84 = por %p82, %p83
      %p85 = scmp.ne.s32.totalorder %s71, %s72
      %p86 = scmp.eq.s32.totalorder %s17, 1
      %p87 = por %p85, %p86
      %p89 = scmp.ne.s32.totalorder %s72, %s88
      %p90 = scmp.eq.s32.totalorder %s17, 0
      %p91 = por %p89, %p90
      %p92 = scmp.le.s32.totalorder 1, %s11
      %p93 = scmp.lt.s32.totalorder %s11, 3
      %p94 = pnand %p92, %p93
      %p95 = pneg %p94
      // Predicated region
      $region9: #{tpu_custom_call.1} parent=5 // pred_check
        _
      $region10: #{tpu_custom_call.1} parent=5 // pred_check_branch
        %97 = sbr.rel (%p94) target = $region12
      $region11: #{tpu_custom_call.1} parent=5 // pred_region
        %s98 = ssub.s32 %s11, 1
        // Predicated region
        $region13: #{tpu_custom_call.1} parent=11 // pred_check
          %p99 = pneg %p58
        $region14: #{tpu_custom_call.1} parent=11 // pred_check_branch
          %101 = sbr.rel (%p99) target = $region16
        $region15: #{tpu_custom_call.1} parent=11 // pred_region
          _
        $region16: #{tpu_custom_call.1} parent=11 // pred_fallthru
          _
      $region12: #{tpu_custom_call.1} parent=5 // pred_fallthru
        _
      %p102 = scmp.lt.s32.totalorder %s11, 2
      // Predicated region
      $region17: #{tpu_custom_call.1} parent=5 // pred_check
        %p103 = pneg %p102
      $region18: #{tpu_custom_call.1} parent=5 // pred_check_branch
        %105 = sbr.rel (%p103) target = $region20
      $region19: #{tpu_custom_call.1} parent=5 // pred_region
        // Predicated region
        $region21: #{tpu_custom_call.1} parent=19 // pred_check
          %p106 = pneg %p31
        $region22: #{tpu_custom_call.1} parent=19 // pred_check_branch
          %108 = sbr.rel (%p106) target = $region24
        $region23: #{tpu_custom_call.1} parent=19 // pred_region
          %p109 = scmp.lt.s32.totalorder %s11, 1
          %s110 = scalar_select %p109, %s11, 1
          %s111 = smul.addr %s110, 8
          %s112 = scalar_lea.vmem %s0, %s111
        $region24: #{tpu_custom_call.1} parent=19 // pred_fallthru
          _
      $region20: #{tpu_custom_call.1} parent=5 // pred_fallthru
        _
      %p113 = scmp.le.s32.totalorder 1, %s11
      %p114 = scmp.lt.s32.totalorder %s11, 3
      %p115 = pnand %p113, %p114
      %p116 = pneg %p115
      // Predicated region
      $region25: #{tpu_custom_call.1} parent=5 // pred_check
        _
      $region26: #{tpu_custom_call.1} parent=5 // pred_check_branch
        %118 = sbr.rel (%p115) target = $region28
      $region27: #{tpu_custom_call.1} parent=5 // pred_region
        %s119 = ssub.s32 %s11, 1
        %p120 = scmp.lt.s32.totalorder %s16, 1
        %s121 = scalar_select %p120, %s16, 1
        %s122 = smul.addr %s121, 8
        %s123 = scalar_lea.vmem %s0, %s122
        %p124 = pneg %p37
        %p125 = pneg %p34
        %p126 = pneg %p58
        %p127 = pneg %p55
        %p128 = pneg %p84
        %p129 = pneg %p81
        %s130 = sand.u32 %s71, 1
        %s131 = scalar_lea.sflag [#allocation3], %s130
        %s132 = sand.u32 %s71, 1
        %s133 = smul.addr %s132, 8
        %s134 = scalar_lea.vmem [#allocation2], %s133
        %p135 = scmp.lt.s32.totalorder %s16, 1
        %s136 = scalar_select %p135, %s16, 1
        %s137 = smul.addr %s136, 8
        %s138 = scalar_lea.vmem %s0, %s137
        %v140 = vld [vmem:[%s138] sm:$0xff]
        %v141 = vlaneseq
        %v142 = vand.u32 %v141, 127
        %143 = vset.pattern.permute.xlu0 0
        %144 = vperm.xlu0 %143, %v140
        %v145 = vpop.permute.xlu0 %144
        %vm146 = vcmp.eq.s32.totalorder %v142, %v145
        %v147 = vsel %vm146, 1, 0
        %v148 = vcvt.s32.f32 %v147
        %v149 = vpack.c.bf16 %v148, %v148
        %v150 = vld [vmem:[%s1] sm:$0xf]
        %v151 = vld [vmem:[%s1 + $0x4] sm:$0xf]
        %v152 = vld [vmem:[%s1 + $0x8] sm:$0xf]
        %v153 = vld [vmem:[%s1 + $0xc] sm:$0xf]
        %v158 = vunpack.c.l.b16 %v150
        %v159 = vunpack.c.l.b16 %v151
        %v160 = vunpack.c.l.b16 %v152
        %v161 = vunpack.c.l.b16 %v153
        %v162 = vpack.c.b16 %v159, %v158
        %v163 = vpack.c.b16 %v161, %v160
        %vm166 = vcmask 261120
        %v168 = vsel %vm166, %v149, 0
        %170 = vmatprep.subr.bf16.mxu0 0
        %171 = vmatpush1.bf16.msra.mxu0 %v162
        %172 = vmatprep.subr.bf16.mxu0 0
        %173 = vmatpush1.bf16.msra.mxu0 %v163
        %174 = vmatprep.subr.bf16.mxu0 0
        %175 = vmatpush1.bf16.msra.mxu0 0
        %176 = vmatprep.subr.bf16.mxu0 0
        %177 = vmatpush1.bf16.msra.mxu0 0
        %178 = vmatprep.subr.bf16.mxu0 0
        %179 = vmatpush1.bf16.msra.mxu0 0
        %180 = vmatprep.subr.bf16.mxu0 0
        %181 = vmatpush1.bf16.msra.mxu0 0
        %182 = vmatprep.subr.bf16.mxu0 0
        %183 = vmatpush1.bf16.msra.mxu0 0
        %184 = vmatprep.subr.bf16.mxu0 0
        %185 = vmatpush1.bf16.msra.mxu0 0
        %186 = vmatprep.subr.bf16.mxu0 0
        %187 = vmatpush1.bf16.msra.mxu0 0
        %188 = vmatprep.subr.bf16.mxu0 0
        %189 = vmatpush1.bf16.msra.mxu0 0
        %190 = vmatprep.subr.bf16.mxu0 0
        %191 = vmatpush1.bf16.msra.mxu0 0
        %192 = vmatprep.subr.bf16.mxu0 0
        %193 = vmatpush1.bf16.msra.mxu0 0
        %194 = vmatprep.subr.bf16.mxu0 0
        %195 = vmatpush1.bf16.msra.mxu0 0
        %196 = vmatprep.subr.bf16.mxu0 0
        %197 = vmatpush1.bf16.msra.mxu0 0
        %198 = vmatprep.subr.bf16.mxu0 0
        %199 = vmatpush1.bf16.msra.mxu0 0
        %200 = vmatprep.subr.bf16.mxu0 0
        %201 = vmatpush1.bf16.msra.mxu0 0
        %202 = vmatprep.mubr.bf16.mxu0 0
        %203 = vmatmul.mubr.bf16.gmra.mrb[0].mxu0 %v168
        %v204 = vpop.f32.mrb[0].mxu0
        %v205 = vadd.f32 0.0, %v204
        %v206 = vpop.f32.mrb[0].mxu0
        %v207 = vpop.f32.mrb[0].mxu0
        %v208 = vpop.f32.mrb[0].mxu0
        %209 = vdwg.mxu0
        %210 = vst [vmem:[%s134] sm:$0xff] %v205
        %s211 = sand.u32 %s71, 1
        %s212 = scalar_lea.sflag [#allocation3], %s211
        %s213 = sand.u32 %s71, 1
        %s214 = smul.addr %s213, 8
        %s215 = scalar_lea.vmem [#allocation2], %s214
        // Predicated region
        $region29: #{tpu_custom_call.1} parent=27 // pred_check
          %p216 = pneg %p81
        $region30: #{tpu_custom_call.1} parent=27 // pred_check_branch
          %218 = sbr.rel (%p216) target = $region32
        $region31: #{tpu_custom_call.1} parent=27 // pred_region
          %s220 = ssub.s32 128, 128
          %221 = vsyncadd %s212, %s220
          %s222 = smul.addr %s16, 128
          %s223 = scalar_lea.hbm %s2, %s222
          %s225 = sshll.u32 %s215, 4
          %s226 = int_to_ptr.vmem [resolvable:$true] %s225
          %228 = dma.vmem_to_hbm [thread:$0]  %s226, 128, %s223, %s212
        $region32: #{tpu_custom_call.1} parent=27 // pred_fallthru
          _
      $region28: #{tpu_custom_call.1} parent=5 // pred_fallthru
        _
      %p229 = scmp.le.s32.totalorder 2, %s11
      // Predicated region
      $region33: #{tpu_custom_call.1} parent=5 // pred_check
        %p230 = pneg %p229
      $region34: #{tpu_custom_call.1} parent=5 // pred_check_branch
        %232 = sbr.rel (%p230) target = $region36
      $region35: #{tpu_custom_call.1} parent=5 // pred_region
        %s233 = ssub.s32 %s11, 2
        // Predicated region
        $region37: #{tpu_custom_call.1} parent=35 // pred_check
          %p234 = pneg %p87
        $region38: #{tpu_custom_call.1} parent=35 // pred_check_branch
          %236 = sbr.rel (%p234) target = $region40
        $region39: #{tpu_custom_call.1} parent=35 // pred_region
          %s237 = sand.u32 %s72, 1
          %s238 = scalar_lea.sflag [#allocation3], %s237
          %s239 = sand.u32 %s72, 1
          %s240 = smul.addr %s239, 8
          %s241 = scalar_lea.vmem [#allocation2], %s240
          %242 = dma.done %s238, 128
        $region40: #{tpu_custom_call.1} parent=35 // pred_fallthru
          _
      $region36: #{tpu_custom_call.1} parent=5 // pred_fallthru
        _
    $region6: #{tpu_custom_call.1} parent=1 // loop_footer
      %s15 = sadd.s32 1, %s11
    $region7: #{tpu_custom_call.1} parent=1 // loop_footer_branch
      %10 = sbr.rel target = $region3
    $region8: #{tpu_custom_call.1} parent=1 // loop_exit
      _
    %243 = vsyncpa [#allocation3], 1
    %s244 = scalar_lea.sflag [#allocation3], 1
    %245 = vsyncpa %s244, 1

// kernel: tpu_custom_call.1
$region0: #{tpu_custom_call.1}
  #allocation0 [shape = 'u32[]', space=smem, size = 0x4, offset = 0x4, fixed_abs, tag = 'smem constant byte address 0x4 - core index']
  #allocation1 [shape = 'u32[144,128]{1,0:T(1,128)}', space=vmem, size = 0x12000, scoped, tag = 'internal scratch']
  %s0 = inlined_call_operand.vmem [shape: s32[16,1], index: 0, kind: input, shape index: {}]
  %s1 = inlined_call_operand.vmem [shape: bf16[32,128], index: 1, kind: input, shape index: {}]
  %s2 = inlined_call_operand.hbm [shape: f32[16,128], index: 2, kind: output, shape index: {}]
  %s3 = sld [smem:[#allocation0]]
  $region41: #{tpu_custom_call.1} parent=0
    _
  %s5 = ssub.s32 1, %s3
  %s6 = scalar_select 0, %s5, %s3
  $region1: #{tpu_custom_call.1} parent=0
    #allocation2 [shape = 'u8[8192]{0}', space=vmem, size = 0x2000, scoped, tag = 'output window, operand 0']
    #allocation3 [shape = 's32[2]{0}', space=sflag, size = 0x8, scoped, tag = 'scoped memory for tpu_custom_call.1']
    %7 = vsyncpa [#allocation3], 0
    %s8 = scalar_lea.sflag [#allocation3], 1
    %9 = vsyncpa %s8, 0
    loop: start=0, step=1, limit=4
    $region2: #{tpu_custom_call.1} parent=1 // loop_pre_header
      _
    $region3: #{tpu_custom_call.1} parent=1 // loop_header
      %s11 = sphi 0, %s15
      %p12 = scmp.ge.s32.totalorder %s11, 4
      %s21 = sphi 0, %s23
      %s24 = sphi 0, %s21
      %s25 = sphi 0, %s24
      %s41 = sphi 0, %s25
      %s45 = sphi 0, %s45
      %s47 = sphi 0, %s45
      %s48 = sphi 0, %s47
      %s62 = sphi 0, %s48
      %s68 = sphi 0, %s70
      %s71 = sphi 0, %s68
      %s72 = sphi 0, %s71
      %s88 = sphi 0, %s72
    $region4: #{tpu_custom_call.1} parent=1 // loop_header_branch
      %14 = sbr.rel (%p12) target = $region8
    $region5: #{tpu_custom_call.1} parent=1 // loop_body
      %s16 = ssub.s32 %s11, 1
      %s17 = ssub.s32 %s11, 2
      %s18 = sadd.s32 %s11, 1
      %s19 = ssub.s32 %s11, %s18
      %p20 = scmp.eq.s32.totalorder %s19, 0
      %s22 = sadd.s32 %s21, 1
      %s23 = scalar_select %p20, %s21, %s22
      %p26 = pneg %p20
      %p27 = scmp.eq.s32.totalorder %s11, 1
      %p28 = por %p26, %p27
      %p29 = scmp.ne.s32.totalorder %s21, %s24
      %p30 = scmp.eq.s32.totalorder %s11, 0
      %p31 = por %p29, %p30
      %p32 = scmp.ne.s32.totalorder %s21, %s24
      %p33 = scmp.eq.s32.totalorder %s16, 1
      %p34 = por %p32, %p33
      %p35 = scmp.ne.s32.totalorder %s24, %s25
      %p36 = scmp.eq.s32.totalorder %s16, 0
      %p37 = por %p35, %p36
      %p38 = scmp.ne.s32.totalorder %s24, %s25
      %p39 = scmp.eq.s32.totalorder %s17, 1
      %p40 = por %p38, %p39
      %p42 = scmp.ne.s32.totalorder %s25, %s41
      %p43 = scmp.eq.s32.totalorder %s17, 0
      %p44 = por %p42, %p43
      %s46 = sadd.s32 %s45, 1
      %p49 = scmp.eq.s32.totalorder %s11, 1
      %p50 = scmp.ne.s32.totalorder %s45, %s47
      %p51 = scmp.eq.s32.totalorder %s11, 0
      %p52 = por %p50, %p51
      %p53 = scmp.ne.s32.totalorder %s45, %s47
      %p54 = scmp.eq.s32.totalorder %s16, 1
      %p55 = por %p53, %p54
      %p56 = scmp.ne.s32.totalorder %s47, %s48
      %p57 = scmp.eq.s32.totalorder %s16, 0
      %p58 = por %p56, %p57
      %p59 = scmp.ne.s32.totalorder %s47, %s48
      %p60 = scmp.eq.s32.totalorder %s17, 1
      %p61 = por %p59, %p60
      %p63 = scmp.ne.s32.totalorder %s48, %s62
      %p64 = scmp.eq.s32.totalorder %s17, 0
      %p65 = por %p63, %p64
      %s66 = ssub.s32 %s11, %s18
      %p67 = scmp.eq.s32.totalorder %s66, 0
      %s69 = sadd.s32 %s68, 1
      %s70 = scalar_select %p67, %s68, %s69
      %p73 = pneg %p67
      %p74 = scmp.eq.s32.totalorder %s11, 1
      %p75 = por %p73, %p74
      %p76 = scmp.ne.s32.totalorder %s68, %s71
      %p77 = scmp.eq.s32.totalorder %s11, 0
      %p78 = por %p76, %p77
      %p79 = scmp.ne.s32.totalorder %s68, %s71
      %p80 = scmp.eq.s32.totalorder %s16, 1
      %p81 = por %p79, %p80
      %p82 = scmp.ne.s32.totalorder %s71, %s72
      %p83 = scmp.eq.s32.totalorder %s16, 0
      %p84 = por %p82, %p83
      %p85 = scmp.ne.s32.totalorder %s71, %s72
      %p86 = scmp.eq.s32.totalorder %s17, 1
      %p87 = por %p85, %p86
      %p89 = scmp.ne.s32.totalorder %s72, %s88
      %p90 = scmp.eq.s32.totalorder %s17, 0
      %p91 = por %p89, %p90
      %p92 = scmp.le.s32.totalorder 1, %s11
      %p93 = scmp.lt.s32.totalorder %s11, 3
      %p94 = pnand %p92, %p93
      %p95 = pneg %p94
      // Predicated region
      $region9: #{tpu_custom_call.1} parent=5 // pred_check
        _
      $region10: #{tpu_custom_call.1} parent=5 // pred_check_branch
        %97 = sbr.rel (%p94) target = $region12
      $region11: #{tpu_custom_call.1} parent=5 // pred_region
        %s98 = ssub.s32 %s11, 1
        // Predicated region
        $region13: #{tpu_custom_call.1} parent=11 // pred_check
          %p99 = pneg %p58
        $region14: #{tpu_custom_call.1} parent=11 // pred_check_branch
          %101 = sbr.rel (%p99) target = $region16
        $region15: #{tpu_custom_call.1} parent=11 // pred_region
          _
        $region16: #{tpu_custom_call.1} parent=11 // pred_fallthru
          _
      $region12: #{tpu_custom_call.1} parent=5 // pred_fallthru
        _
      %p102 = scmp.lt.s32.totalorder %s11, 2
      // Predicated region
      $region17: #{tpu_custom_call.1} parent=5 // pred_check
        %p103 = pneg %p102
      $region18: #{tpu_custom_call.1} parent=5 // pred_check_branch
        %105 = sbr.rel (%p103) target = $region20
      $region19: #{tpu_custom_call.1} parent=5 // pred_region
        // Predicated region
        $region21: #{tpu_custom_call.1} parent=19 // pred_check
          %p106 = pneg %p31
        $region22: #{tpu_custom_call.1} parent=19 // pred_check_branch
          %108 = sbr.rel (%p106) target = $region24
        $region23: #{tpu_custom_call.1} parent=19 // pred_region
          %p109 = scmp.lt.s32.totalorder %s11, 1
          %s110 = scalar_select %p109, %s11, 1
          %s111 = smul.addr %s110, 8
          %s112 = scalar_lea.vmem %s0, %s111
        $region24: #{tpu_custom_call.1} parent=19 // pred_fallthru
          _
      $region20: #{tpu_custom_call.1} parent=5 // pred_fallthru
        _
      %p113 = scmp.le.s32.totalorder 1, %s11
      %p114 = scmp.lt.s32.totalorder %s11, 3
      %p115 = pnand %p113, %p114
      %p116 = pneg %p115
      // Predicated region
      $region25: #{tpu_custom_call.1} parent=5 // pred_check
        _
      $region26: #{tpu_custom_call.1} parent=5 // pred_check_branch
        %118 = sbr.rel (%p115) target = $region28
      $region27: #{tpu_custom_call.1} parent=5 // pred_region
        %s119 = ssub.s32 %s11, 1
        %p120 = scmp.lt.s32.totalorder %s16, 1
        %s121 = scalar_select %p120, %s16, 1
        %s122 = smul.addr %s121, 8
        %s123 = scalar_lea.vmem %s0, %s122
        %p124 = pneg %p37
        %p125 = pneg %p34
        %p126 = pneg %p58
        %p127 = pneg %p55
        %p128 = pneg %p84
        %p129 = pneg %p81
        %s130 = sand.u32 %s71, 1
        %s131 = scalar_lea.sflag [#allocation3], %s130
        %s132 = sand.u32 %s71, 1
        %s133 = smul.addr %s132, 8
        %s134 = scalar_lea.vmem [#allocation2], %s133
        %p135 = scmp.lt.s32.totalorder %s16, 1
        %s136 = scalar_select %p135, %s16, 1
        %s137 = smul.addr %s136, 8
        %s138 = scalar_lea.vmem %s0, %s137
        %v140 = vld [vmem:[%s138] sm:$0xff]
        %v141 = vlaneseq
        %v142 = vand.u32 %v141, 127
        %143 = vset.pattern.permute.xlu0 0
        %144 = vperm.xlu0 %143, %v140
        %v145 = vpop.permute.xlu0 %144
        %vm146 = vcmp.eq.s32.totalorder %v142, %v145
        %v147 = vsel %vm146, 1, 0
        %v148 = vcvt.s32.f32 %v147
        %v149 = vpack.c.bf16 %v148, %v148
        %v150 = vld [vmem:[%s1] sm:$0xf]
        %v151 = vld [vmem:[%s1 + $0x4] sm:$0xf]
        %v152 = vld [vmem:[%s1 + $0x8] sm:$0xf]
        %v153 = vld [vmem:[%s1 + $0xc] sm:$0xf]
        %v158 = vunpack.c.l.b16 %v150
        %v159 = vunpack.c.l.b16 %v151
        %v160 = vunpack.c.l.b16 %v152
        %v161 = vunpack.c.l.b16 %v153
        %v162 = vpack.c.b16 %v159, %v158
        %v163 = vpack.c.b16 %v161, %v160
        %vm166 = vcmask 261120
        %v168 = vsel %vm166, %v149, 0
        %170 = vmatprep.subr.bf16.mxu0 0
        %171 = vmatpush1.bf16.msra.mxu0 %v162
        %172 = vmatprep.subr.bf16.mxu0 0
        %173 = vmatpush1.bf16.msra.mxu0 %v163
        %174 = vmatprep.subr.bf16.mxu0 0
        %175 = vmatpush1.bf16.msra.mxu0 0
        %176 = vmatprep.subr.bf16.mxu0 0
        %177 = vmatpush1.bf16.msra.mxu0 0
        %178 = vmatprep.subr.bf16.mxu0 0
        %179 = vmatpush1.bf16.msra.mxu0 0
        %180 = vmatprep.subr.bf16.mxu0 0
        %181 = vmatpush1.bf16.msra.mxu0 0
        %182 = vmatprep.subr.bf16.mxu0 0
        %183 = vmatpush1.bf16.msra.mxu0 0
        %184 = vmatprep.subr.bf16.mxu0 0
        %185 = vmatpush1.bf16.msra.mxu0 0
        %186 = vmatprep.subr.bf16.mxu0 0
        %187 = vmatpush1.bf16.msra.mxu0 0
        %188 = vmatprep.subr.bf16.mxu0 0
        %189 = vmatpush1.bf16.msra.mxu0 0
        %190 = vmatprep.subr.bf16.mxu0 0
        %191 = vmatpush1.bf16.msra.mxu0 0
        %192 = vmatprep.subr.bf16.mxu0 0
        %193 = vmatpush1.bf16.msra.mxu0 0
        %194 = vmatprep.subr.bf16.mxu0 0
        %195 = vmatpush1.bf16.msra.mxu0 0
        %196 = vmatprep.subr.bf16.mxu0 0
        %197 = vmatpush1.bf16.msra.mxu0 0
        %198 = vmatprep.subr.bf16.mxu0 0
        %199 = vmatpush1.bf16.msra.mxu0 0
        %200 = vmatprep.subr.bf16.mxu0 0
        %201 = vmatpush1.bf16.msra.mxu0 0
        %202 = vmatprep.mubr.bf16.mxu0 0
        %203 = vmatmul.mubr.bf16.gmra.mrb[0].mxu0 %v168
        %v204 = vpop.f32.mrb[0].mxu0
        %v205 = vadd.f32 0.0, %v204
        %v206 = vpop.f32.mrb[0].mxu0
        %v207 = vpop.f32.mrb[0].mxu0
        %v208 = vpop.f32.mrb[0].mxu0
        %209 = vdwg.mxu0
        %210 = vst [vmem:[%s134] sm:$0xff] %v205
        %s211 = sand.u32 %s71, 1
        %s212 = scalar_lea.sflag [#allocation3], %s211
        %s213 = sand.u32 %s71, 1
        %s214 = smul.addr %s213, 8
        %s215 = scalar_lea.vmem [#allocation2], %s214
        // Predicated region
        $region29: #{tpu_custom_call.1} parent=27 // pred_check
          %p216 = pneg %p81
        $region30: #{tpu_custom_call.1} parent=27 // pred_check_branch
          %218 = sbr.rel (%p216) target = $region32
        $region31: #{tpu_custom_call.1} parent=27 // pred_region
          %s220 = ssub.s32 128, 128
          %221 = vsyncadd %s212, %s220
          %s222 = smul.addr %s16, 128
          %s223 = scalar_lea.hbm %s2, %s222
          %s225 = sshll.u32 %s215, 4
          %s226 = int_to_ptr.vmem [resolvable:$true] %s225
          %228 = dma.vmem_to_hbm [thread:$0]  %s226, 128, %s223, %s212
        $region32: #{tpu_custom_call.1} parent=27 // pred_fallthru
          _
      $region28: #{tpu_custom_call.1} parent=5 // pred_fallthru
        _
      %p229 = scmp.le.s32.totalorder 2, %s11
      // Predicated region
      $region33: #{tpu_custom_call.1} parent=5 // pred_check
        %p230 = pneg %p229
      $region34: #{tpu_custom_call.1} parent=5 // pred_check_branch
        %232 = sbr.rel (%p230) target = $region36
      $region35: #{tpu_custom_call.1} parent=5 // pred_region
        %s233 = ssub.s32 %s11, 2
        // Predicated region
        $region37: #{tpu_custom_call.1} parent=35 // pred_check
          %p234 = pneg %p87
        $region38: #{tpu_custom_call.1} parent=35 // pred_check_branch
          %236 = sbr.rel (%p234) target = $region40
        $region39: #{tpu_custom_call.1} parent=35 // pred_region
          %s237 = sand.u32 %s72, 1
          %s238 = scalar_lea.sflag [#allocation3], %s237
          %s239 = sand.u32 %s72, 1
          %s240 = smul.addr %s239, 8
          %s241 = scalar_lea.vmem [#allocation2], %s240
          %242 = dma.done %s238, 128
        $region40: #{tpu_custom_call.1} parent=35 // pred_fallthru
          _
      $region36: #{tpu_custom_call.1} parent=5 // pred_fallthru
        _
    $region6: #{tpu_custom_call.1} parent=1 // loop_footer
      %s15 = sadd.s32 1, %s11
    $region7: #{tpu_custom_call.1} parent=1 // loop_footer_branch
      %10 = sbr.rel target = $region3
    $region8: #{tpu_custom_call.1} parent=1 // loop_exit
      _
    %243 = vsyncpa [#allocation3], 1
    %s244 = scalar_lea.sflag [#allocation3], 1
    %245 = vsyncpa %s244, 1

</llo_original>
